<compile_context>
chip_gen: v5e
topology: v5e:2x2
jax: 0.10.0
libtpu: 0.0.40
codegen_flags: <defaults>
</compile_context>

<pallas_src>
import jax
import jax.numpy as jnp
import numpy as np
from jax.experimental import pallas as pl
from jax.experimental.pallas import tpu as pltpu


def _upsample_conv_kernel(xm_ref, xh_ref, w_ref, b_ref, o_ref):
    """One (batch, row-band) tile.

    xm_ref: (1, TA, W+2, C)     main band of zero-padded input rows
    xh_ref: (1, 2,  W+2, C)     2-row halo directly below the band
    w_ref:  (4, 4*C, C)         per-phase merged tap weights (4*Ci, Co), VMEM resident
    b_ref:  (1, C)              bias (f32), VMEM resident
    o_ref:  (1, 1, 4, TA*W, C)  phase-separated output
    """
    ta = xm_ref.shape[1]
    wp = xm_ref.shape[2]
    c = xm_ref.shape[3]
    w = wp - 2

    band = jnp.concatenate([xm_ref[0], xh_ref[0]], axis=0)   # (TA+2, W+2, C)
    bias = b_ref[...].astype(jnp.float32)                    # (1, C)

    # The nine shifted 3x3 windows of the original-resolution band, flattened
    # into (TA*W, C) matmul operands.  Built once, shared across phases.
    win = [[band[r:r + ta, s:s + w, :].reshape(ta * w, c)
            for s in range(3)] for r in range(3)]

    for di in range(2):
        for dj in range(2):
            p = 2 * di + dj
            # Merge the 4 taps of this phase into one contraction of depth 4*C.
            lhs = jnp.concatenate(
                [win[di + rh][dj + rw] for rh in range(2) for rw in range(2)],
                axis=-1)                                      # (TA*W, 4*C)
            acc = jnp.dot(lhs, w_ref[p],
                          preferred_element_type=jnp.float32)  # (TA*W, C) f32
            o_ref[0, 0, p] = (acc + bias).astype(o_ref.dtype)


def _phase_weights(weight):
    """(Co, Ci, 3, 3) PyTorch conv weight -> (4, 4*Ci, Co) merged phase weights."""
    groups = {0: ([0], [1, 2]), 1: ([0, 1], [2])}
    phases = []
    for di in (0, 1):
        gh = groups[di]
        for dj in (0, 1):
            gw = groups[dj]
            taps = []
            for rh in (0, 1):
                for rw in (0, 1):
                    wt = weight[:, :, gh[rh], :][:, :, :, gw[rw]].sum(axis=(2, 3))
                    taps.append(wt.T)                       # (Ci, Co)
            phases.append(jnp.stack(taps, axis=0))          # (4, Ci, Co)
    w4 = jnp.stack(phases, axis=0)                           # (4, 4, Ci, Co)
    co = weight.shape[0]
    ci = weight.shape[1]
    # Tap-major row blocks, matching the kernel's lhs channel-concat order.
    return w4.reshape(4, 4 * ci, co)                         # (4, 4*Ci, Co)


def upsample(x_nchw, weight, bias, *, row_tile=8, compute_dtype=jnp.bfloat16):
    """Forward of Upsample. x: (B, C, H, W); weight: (C, C, 3, 3); bias: (C,)."""
    B, C, H, W = x_nchw.shape
    assert weight.shape == (C, C, 3, 3) and bias.shape == (C,)
    TA = int(row_tile)
    assert TA >= 2 and TA % 2 == 0, "row_tile must be even"
    n_t = (H + TA - 1) // TA
    Hq = n_t * TA
    Wp = W + 2
    out_dtype = x_nchw.dtype

    # NCHW -> NHWC, zero-pad spatially by 1 (plus bottom rows up to a row-tile
    # multiple; the corresponding extra output rows are sliced away below).
    # TODO(synk): accept/emit NHWC at the module boundary to drop these transposes.
    x = jnp.transpose(x_nchw, (0, 2, 3, 1))
    x = jnp.pad(x, ((0, 0), (1, 1 + Hq - H), (1, 1), (0, 0)))
    x = x.astype(compute_dtype)

    w_all = _phase_weights(weight).astype(compute_dtype)     # (4, 4*C, C)
    b2 = bias.astype(jnp.float32).reshape(1, C)

    flops = 2 * B * Hq * W * 16 * C * C
    bytes_accessed = (int(x.size) * x.dtype.itemsize
                      + int(w_all.size) * w_all.dtype.itemsize + C * 4
                      + B * n_t * 4 * TA * W * C * jnp.dtype(out_dtype).itemsize)

    half_ta = TA // 2
    o = pl.pallas_call(
        _upsample_conv_kernel,
        out_shape=jax.ShapeDtypeStruct((B, n_t, 4, TA * W, C), out_dtype),
        grid=(B, n_t),
        in_specs=[
            # main band: padded rows [i*TA, (i+1)*TA)
            pl.BlockSpec((1, TA, Wp, C), lambda bb, ii: (bb, ii, 0, 0)),
            # 2-row halo directly below the band (same array, second spec)
            pl.BlockSpec((1, 2, Wp, C),
                         lambda bb, ii: (bb, (ii + 1) * half_ta, 0, 0)),
            # resident phase weights / bias
            pl.BlockSpec((4, 4 * C, C), lambda bb, ii: (0, 0, 0)),
            pl.BlockSpec((1, C), lambda bb, ii: (0, 0)),
        ],
        out_specs=pl.BlockSpec((1, 1, 4, TA * W, C),
                               lambda bb, ii: (bb, ii, 0, 0, 0)),
        compiler_params=pltpu.CompilerParams(
            dimension_semantics=("parallel", "parallel"),
            vmem_limit_bytes=32 * 1024 * 1024),
        cost_estimate=pl.CostEstimate(flops=flops, transcendentals=0,
                                      bytes_accessed=int(bytes_accessed)),
    )(x, x, w_all, b2)

    # Interleave the 4 sub-pixel phases while converting to NCHW (one transpose).
    o = o.reshape(B, n_t, 2, 2, TA, W, C)
    o = jnp.transpose(o, (0, 6, 1, 4, 2, 5, 3))   # (B, C, n_t, TA, di, W, dj)
    o = o.reshape(B, C, 2 * Hq, 2 * W)
    if Hq != H:
        o = o[:, :, :2 * H, :]
    return o


def _reference(x_nchw, weight, bias):
    # Pure-JAX reference: nearest 2x upsample + 3x3 same conv (XLA).
    up = jnp.repeat(jnp.repeat(x_nchw, 2, axis=2), 2, axis=3)
    y = jax.lax.conv_general_dilated(
        up, weight, window_strides=(1, 1), padding=((1, 1), (1, 1)),
        dimension_numbers=("NCHW", "OIHW", "NCHW"))
    return y + bias.reshape(1, -1, 1, 1)


if __name__ == "__main__":
    key = jax.random.PRNGKey(0)
    kx, kw, kb = jax.random.split(key, 3)

    B, C, H, W = 2, 4, 16, 16
    x = jax.random.normal(kx, (B, C, H, W), dtype=jnp.float32)
    # Deterministic synthetic parameters (shapes from nn.Conv2d(C, C, 3, padding=1)).
    weight = 0.1 * jax.random.normal(kw, (C, C, 3, 3), dtype=jnp.float32)
    bias = 0.1 * jax.random.normal(kb, (C,), dtype=jnp.float32)

    y = upsample(x, weight, bias)
    jax.block_until_ready(y)

    y_ref = _reference(x, weight, bias)
    assert y.shape == y_ref.shape == (B, C, 2 * H, 2 * W), y.shape
    np.testing.assert_allclose(np.asarray(y), np.asarray(y_ref),
                               rtol=2e-2, atol=2e-2)
    print("KERNEL_OK")
</pallas_src>

<mosaic_0001>
module attributes {stable_mosaic.version = 11 : i64} {
  func.func @_upsample_conv_kernel(%arg0: i32, %arg1: i32, %arg2: memref<1x8x18x4xbf16, #tpu.memory_space<vmem>>, %arg3: memref<1x2x18x4xbf16, #tpu.memory_space<vmem>>, %arg4: memref<4x16x4xbf16, #tpu.memory_space<vmem>>, %arg5: memref<1x4xf32, #tpu.memory_space<vmem>>, %arg6: memref<1x1x4x128x4xf32, #tpu.memory_space<vmem>>) attributes {dimension_semantics = [#tpu.dimension_semantics<parallel>, #tpu.dimension_semantics<parallel>], iteration_bounds = array<i64: 2, 2>, scalar_prefetch = 0 : i64, scratch_operands = 0 : i64, tpu.core_type = #tpu.core_type<tc>, window_params = [{transform_indices = @transform_0, window_bounds = array<i64: 1, 8, 18, 4>}, {transform_indices = @transform_1, window_bounds = array<i64: 1, 2, 18, 4>}, {pipeline_mode = #tpu.pipeline_mode<synchronous>, transform_indices = @transform_2, window_bounds = array<i64: 4, 16, 4>}, {pipeline_mode = #tpu.pipeline_mode<synchronous>, transform_indices = @transform_3, window_bounds = array<i64: 1, 4>}, {transform_indices = @transform_4, window_bounds = array<i64: 1, 1, 4, 128, 4>}]} {
    %c0 = arith.constant 0 : index
    %c0_0 = arith.constant 0 : index
    %c0_1 = arith.constant 0 : index
    %c0_2 = arith.constant 0 : index
    %0 = vector.load %arg2[%c0, %c0_0, %c0_1, %c0_2] : memref<1x8x18x4xbf16, #tpu.memory_space<vmem>>, vector<1x8x18x4xbf16>
    %1 = vector.shape_cast %0 : vector<1x8x18x4xbf16> to vector<8x18x4xbf16>
    %c0_3 = arith.constant 0 : index
    %c0_4 = arith.constant 0 : index
    %c0_5 = arith.constant 0 : index
    %c0_6 = arith.constant 0 : index
    %2 = vector.load %arg3[%c0_3, %c0_4, %c0_5, %c0_6] : memref<1x2x18x4xbf16, #tpu.memory_space<vmem>>, vector<1x2x18x4xbf16>
    %3 = vector.shape_cast %2 : vector<1x2x18x4xbf16> to vector<2x18x4xbf16>
    %4 = tpu.concatenate %1, %3 in 0 : vector<8x18x4xbf16>, vector<2x18x4xbf16> -> vector<10x18x4xbf16>
    %c0_7 = arith.constant 0 : index
    %c0_8 = arith.constant 0 : index
    %5 = vector.load %arg5[%c0_7, %c0_8] : memref<1x4xf32, #tpu.memory_space<vmem>>, vector<1x4xf32>
    %6 = vector.extract_strided_slice %4 {offsets = [0, 0, 0], sizes = [8, 16, 4], strides = [1, 1, 1]} : vector<10x18x4xbf16> to vector<8x16x4xbf16>
    %7 = vector.shape_cast %6 : vector<8x16x4xbf16> to vector<128x4xbf16>
    %8 = vector.extract_strided_slice %4 {offsets = [0, 1, 0], sizes = [8, 16, 4], strides = [1, 1, 1]} : vector<10x18x4xbf16> to vector<8x16x4xbf16>
    %9 = vector.shape_cast %8 : vector<8x16x4xbf16> to vector<128x4xbf16>
    %10 = vector.extract_strided_slice %4 {offsets = [0, 2, 0], sizes = [8, 16, 4], strides = [1, 1, 1]} : vector<10x18x4xbf16> to vector<8x16x4xbf16>
    %11 = vector.shape_cast %10 : vector<8x16x4xbf16> to vector<128x4xbf16>
    %12 = vector.extract_strided_slice %4 {offsets = [1, 0, 0], sizes = [8, 16, 4], strides = [1, 1, 1]} : vector<10x18x4xbf16> to vector<8x16x4xbf16>
    %13 = vector.shape_cast %12 : vector<8x16x4xbf16> to vector<128x4xbf16>
    %14 = vector.extract_strided_slice %4 {offsets = [1, 1, 0], sizes = [8, 16, 4], strides = [1, 1, 1]} : vector<10x18x4xbf16> to vector<8x16x4xbf16>
    %15 = vector.shape_cast %14 : vector<8x16x4xbf16> to vector<128x4xbf16>
    %16 = vector.extract_strided_slice %4 {offsets = [1, 2, 0], sizes = [8, 16, 4], strides = [1, 1, 1]} : vector<10x18x4xbf16> to vector<8x16x4xbf16>
    %17 = vector.shape_cast %16 : vector<8x16x4xbf16> to vector<128x4xbf16>
    %18 = vector.extract_strided_slice %4 {offsets = [2, 0, 0], sizes = [8, 16, 4], strides = [1, 1, 1]} : vector<10x18x4xbf16> to vector<8x16x4xbf16>
    %19 = vector.shape_cast %18 : vector<8x16x4xbf16> to vector<128x4xbf16>
    %20 = vector.extract_strided_slice %4 {offsets = [2, 1, 0], sizes = [8, 16, 4], strides = [1, 1, 1]} : vector<10x18x4xbf16> to vector<8x16x4xbf16>
    %21 = vector.shape_cast %20 : vector<8x16x4xbf16> to vector<128x4xbf16>
    %22 = vector.extract_strided_slice %4 {offsets = [2, 2, 0], sizes = [8, 16, 4], strides = [1, 1, 1]} : vector<10x18x4xbf16> to vector<8x16x4xbf16>
    %23 = vector.shape_cast %22 : vector<8x16x4xbf16> to vector<128x4xbf16>
    %24 = tpu.concatenate %7, %9, %13, %15 in 1 : vector<128x4xbf16>, vector<128x4xbf16>, vector<128x4xbf16>, vector<128x4xbf16> -> vector<128x16xbf16>
    %c0_9 = arith.constant 0 : index
    %c0_10 = arith.constant 0 : index
    %c0_11 = arith.constant 0 : index
    %25 = vector.load %arg4[%c0_9, %c0_10, %c0_11] : memref<4x16x4xbf16, #tpu.memory_space<vmem>>, vector<1x16x4xbf16>
    %26 = vector.shape_cast %25 : vector<1x16x4xbf16> to vector<16x4xbf16>
    %cst = arith.constant dense<0.000000e+00> : vector<128x4xf32>
    %27 = tpu.matmul %24, %26, %cst {dimension_numbers = #tpu.dot_dimension_numbers<[1], [0], [0], [1], [0, 0, 1, 1], [], []>} : vector<128x16xbf16>, vector<16x4xbf16>, vector<128x4xf32> -> vector<128x4xf32>
    %28 = vector.broadcast %5 : vector<1x4xf32> to vector<128x4xf32>
    %29 = arith.addf %27, %28 : vector<128x4xf32>
    %c0_12 = arith.constant 0 : index
    %c0_13 = arith.constant 0 : index
    %c0_14 = arith.constant 0 : index
    %c0_15 = arith.constant 0 : index
    %c0_16 = arith.constant 0 : index
    %30 = vector.load %arg6[%c0_12, %c0_13, %c0_14, %c0_15, %c0_16] : memref<1x1x4x128x4xf32, #tpu.memory_space<vmem>>, vector<1x1x1x128x4xf32>
    %31 = vector.shape_cast %30 : vector<1x1x1x128x4xf32> to vector<128x4xf32>
    %32 = vector.shape_cast %29 : vector<128x4xf32> to vector<1x1x1x128x4xf32>
    tpu.vector_store %arg6[%c0_12, %c0_13, %c0_14, %c0_15, %c0_16], %32 {strides = array<i32>} : memref<1x1x4x128x4xf32, #tpu.memory_space<vmem>>, vector<1x1x1x128x4xf32>,
    %33 = tpu.concatenate %9, %11, %15, %17 in 1 : vector<128x4xbf16>, vector<128x4xbf16>, vector<128x4xbf16>, vector<128x4xbf16> -> vector<128x16xbf16>
    %c1 = arith.constant 1 : index
    %c0_17 = arith.constant 0 : index
    %c0_18 = arith.constant 0 : index
    %34 = vector.load %arg4[%c1, %c0_17, %c0_18] : memref<4x16x4xbf16, #tpu.memory_space<vmem>>, vector<1x16x4xbf16>
    %35 = vector.shape_cast %34 : vector<1x16x4xbf16> to vector<16x4xbf16>
    %cst_19 = arith.constant dense<0.000000e+00> : vector<128x4xf32>
    %36 = tpu.matmul %33, %35, %cst_19 {dimension_numbers = #tpu.dot_dimension_numbers<[1], [0], [0], [1], [0, 0, 1, 1], [], []>} : vector<128x16xbf16>, vector<16x4xbf16>, vector<128x4xf32> -> vector<128x4xf32>
    %37 = vector.broadcast %5 : vector<1x4xf32> to vector<128x4xf32>
    %38 = arith.addf %36, %37 : vector<128x4xf32>
    %c0_20 = arith.constant 0 : index
    %c0_21 = arith.constant 0 : index
    %c1_22 = arith.constant 1 : index
    %c0_23 = arith.constant 0 : index
    %c0_24 = arith.constant 0 : index
    %39 = vector.load %arg6[%c0_20, %c0_21, %c1_22, %c0_23, %c0_24] : memref<1x1x4x128x4xf32, #tpu.memory_space<vmem>>, vector<1x1x1x128x4xf32>
    %40 = vector.shape_cast %39 : vector<1x1x1x128x4xf32> to vector<128x4xf32>
    %41 = vector.shape_cast %38 : vector<128x4xf32> to vector<1x1x1x128x4xf32>
    tpu.vector_store %arg6[%c0_20, %c0_21, %c1_22, %c0_23, %c0_24], %41 {strides = array<i32>} : memref<1x1x4x128x4xf32, #tpu.memory_space<vmem>>, vector<1x1x1x128x4xf32>,
    %42 = tpu.concatenate %13, %15, %19, %21 in 1 : vector<128x4xbf16>, vector<128x4xbf16>, vector<128x4xbf16>, vector<128x4xbf16> -> vector<128x16xbf16>
    %c2 = arith.constant 2 : index
    %c0_25 = arith.constant 0 : index
    %c0_26 = arith.constant 0 : index
    %43 = vector.load %arg4[%c2, %c0_25, %c0_26] : memref<4x16x4xbf16, #tpu.memory_space<vmem>>, vector<1x16x4xbf16>
    %44 = vector.shape_cast %43 : vector<1x16x4xbf16> to vector<16x4xbf16>
    %cst_27 = arith.constant dense<0.000000e+00> : vector<128x4xf32>
    %45 = tpu.matmul %42, %44, %cst_27 {dimension_numbers = #tpu.dot_dimension_numbers<[1], [0], [0], [1], [0, 0, 1, 1], [], []>} : vector<128x16xbf16>, vector<16x4xbf16>, vector<128x4xf32> -> vector<128x4xf32>
    %46 = vector.broadcast %5 : vector<1x4xf32> to vector<128x4xf32>
    %47 = arith.addf %45, %46 : vector<128x4xf32>
    %c0_28 = arith.constant 0 : index
    %c0_29 = arith.constant 0 : index
    %c2_30 = arith.constant 2 : index
    %c0_31 = arith.constant 0 : index
    %c0_32 = arith.constant 0 : index
    %48 = vector.load %arg6[%c0_28, %c0_29, %c2_30, %c0_31, %c0_32] : memref<1x1x4x128x4xf32, #tpu.memory_space<vmem>>, vector<1x1x1x128x4xf32>
    %49 = vector.shape_cast %48 : vector<1x1x1x128x4xf32> to vector<128x4xf32>
    %50 = vector.shape_cast %47 : vector<128x4xf32> to vector<1x1x1x128x4xf32>
    tpu.vector_store %arg6[%c0_28, %c0_29, %c2_30, %c0_31, %c0_32], %50 {strides = array<i32>} : memref<1x1x4x128x4xf32, #tpu.memory_space<vmem>>, vector<1x1x1x128x4xf32>,
    %51 = tpu.concatenate %15, %17, %21, %23 in 1 : vector<128x4xbf16>, vector<128x4xbf16>, vector<128x4xbf16>, vector<128x4xbf16> -> vector<128x16xbf16>
    %c3 = arith.constant 3 : index
    %c0_33 = arith.constant 0 : index
    %c0_34 = arith.constant 0 : index
    %52 = vector.load %arg4[%c3, %c0_33, %c0_34] : memref<4x16x4xbf16, #tpu.memory_space<vmem>>, vector<1x16x4xbf16>
    %53 = vector.shape_cast %52 : vector<1x16x4xbf16> to vector<16x4xbf16>
    %cst_35 = arith.constant dense<0.000000e+00> : vector<128x4xf32>
    %54 = tpu.matmul %51, %53, %cst_35 {dimension_numbers = #tpu.dot_dimension_numbers<[1], [0], [0], [1], [0, 0, 1, 1], [], []>} : vector<128x16xbf16>, vector<16x4xbf16>, vector<128x4xf32> -> vector<128x4xf32>
    %55 = vector.broadcast %5 : vector<1x4xf32> to vector<128x4xf32>
    %56 = arith.addf %54, %55 : vector<128x4xf32>
    %c0_36 = arith.constant 0 : index
    %c0_37 = arith.constant 0 : index
    %c3_38 = arith.constant 3 : index
    %c0_39 = arith.constant 0 : index
    %c0_40 = arith.constant 0 : index
    %57 = vector.load %arg6[%c0_36, %c0_37, %c3_38, %c0_39, %c0_40] : memref<1x1x4x128x4xf32, #tpu.memory_space<vmem>>, vector<1x1x1x128x4xf32>
    %58 = vector.shape_cast %57 : vector<1x1x1x128x4xf32> to vector<128x4xf32>
    %59 = vector.shape_cast %56 : vector<128x4xf32> to vector<1x1x1x128x4xf32>
    tpu.vector_store %arg6[%c0_36, %c0_37, %c3_38, %c0_39, %c0_40], %59 {strides = array<i32>} : memref<1x1x4x128x4xf32, #tpu.memory_space<vmem>>, vector<1x1x1x128x4xf32>,
    return
  }
  func.func @transform_0(%arg0: i32, %arg1: i32) -> (i32, i32, i32, i32) {
    %c0_i32 = arith.constant 0 : i32
    %c0_i32_0 = arith.constant 0 : i32
    %c0_i32_1 = arith.constant 0 : i32
    return %arg0, %arg1, %c0_i32, %c0_i32_0 : i32, i32, i32, i32
  }
  func.func @transform_1(%arg0: i32, %arg1: i32) -> (i32, i32, i32, i32) {
    %c1_i32 = arith.constant 1 : i32
    %0 = arith.addi %arg1, %c1_i32 : i32
    %c4_i32 = arith.constant 4 : i32
    %1 = arith.muli %0, %c4_i32 : i32
    %c0_i32 = arith.constant 0 : i32
    %c0_i32_0 = arith.constant 0 : i32
    %c0_i32_1 = arith.constant 0 : i32
    return %arg0, %1, %c0_i32, %c0_i32_0 : i32, i32, i32, i32
  }
  func.func @transform_2(%arg0: i32, %arg1: i32) -> (i32, i32, i32) {
    %c0_i32 = arith.constant 0 : i32
    %c0_i32_0 = arith.constant 0 : i32
    %c0_i32_1 = arith.constant 0 : i32
    %c0_i32_2 = arith.constant 0 : i32
    return %c0_i32, %c0_i32_0, %c0_i32_1 : i32, i32, i32
  }
  func.func @transform_3(%arg0: i32, %arg1: i32) -> (i32, i32) {
    %c0_i32 = arith.constant 0 : i32
    %c0_i32_0 = arith.constant 0 : i32
    %c0_i32_1 = arith.constant 0 : i32
    return %c0_i32, %c0_i32_0 : i32, i32
  }
  func.func @transform_4(%arg0: i32, %arg1: i32) -> (i32, i32, i32, i32, i32) {
    %c0_i32 = arith.constant 0 : i32
    %c0_i32_0 = arith.constant 0 : i32
    %c0_i32_1 = arith.constant 0 : i32
    %c0_i32_2 = arith.constant 0 : i32
    return %arg0, %arg1, %c0_i32, %c0_i32_0, %c0_i32_1 : i32, i32, i32, i32, i32
  }
}

</mosaic_0001>

<llo_original>
// kernel: tpu_custom_call.1
$region0: #{tpu_custom_call.1}
  #allocation0 [shape = 'u32[]', space=smem, size = 0x4, offset = 0x4, fixed_abs, tag = 'smem constant byte address 0x4 - core index']
  #allocation1 [shape = 'u32[72,128]{1,0:T(1,128)}', space=vmem, size = 0x9000, scoped, tag = 'internal scratch']
  %s0 = inlined_call_operand.vmem [shape: bf16[2,18,18,4], index: 0, kind: input, shape index: {}]
  %s1 = inlined_call_operand.vmem [shape: bf16[2,18,18,4], index: 1, kind: input, shape index: {}]
  %s2 = inlined_call_operand.vmem [shape: bf16[4,16,4], index: 2, kind: input, shape index: {}]
  %s3 = inlined_call_operand.vmem [shape: f32[1,4], index: 3, kind: input, shape index: {}]
  %s4 = inlined_call_operand.vmem [shape: f32[2,2,4,128,4], index: 4, kind: output, shape index: {}]
  %s5 = sld [smem:[#allocation0]]
  $region49: #{tpu_custom_call.1} parent=0
    _
  %s7 = ssub.s32 1, %s5
  %s8 = scalar_select 0, %s7, %s5
  loop: start=0, step=1, limit=6
  $region2: #{tpu_custom_call.1} parent=0 // loop_pre_header
    _
  $region3: #{tpu_custom_call.1} parent=0 // loop_header
    %s10 = sphi 0, %s14
    %p11 = scmp.ge.s32.totalorder %s10, 6
    %s17 = sphi 0, %s29
    %s18 = sphi 0, %s25
    %s19 = sphi 0, %s17
    %s20 = sphi 0, %s18
    %s21 = sphi 0, %s19
    %s22 = sphi 0, %s20
    %s34 = sphi 0, %s36
    %s37 = sphi 0, %s34
    %s38 = sphi 0, %s37
    %s54 = sphi 0, %s38
    %s66 = sphi 0, %s68
    %s69 = sphi 0, %s66
    %s70 = sphi 0, %s69
    %s86 = sphi 0, %s70
    %s90 = sphi 0, %s90
    %s92 = sphi 0, %s90
    %s93 = sphi 0, %s92
    %s107 = sphi 0, %s93
    %s111 = sphi 0, %s111
    %s113 = sphi 0, %s111
    %s114 = sphi 0, %s113
    %s128 = sphi 0, %s114
    %s136 = sphi 0, %s138
    %s139 = sphi 0, %s136
    %s140 = sphi 0, %s139
    %s156 = sphi 0, %s140
  $region4: #{tpu_custom_call.1} parent=0 // loop_header_branch
    %13 = sbr.rel (%p11) target = $region8
  $region5: #{tpu_custom_call.1} parent=0 // loop_body
    %s15 = ssub.s32 %s10, 1
    %s16 = ssub.s32 %s10, 2
    %s23 = sadd.s32 1, %s18
    %p24 = scmp.ge.s32.totalorder %s23, 2
    %s25 = scalar_select %p24, 0, %s23
    %s26 = sadd.s32 1, %s17
    %s27 = scalar_select %p24, %s26, %s17
    %p28 = scmp.ge.s32.totalorder %s27, 2
    %s29 = scalar_select %p28, 0, %s27
    %s30 = ssub.s32 %s17, %s29
    %s31 = ssub.s32 %s18, %s25
    %s32 = sor.u32 %s30, %s31
    %p33 = scmp.eq.s32.totalorder %s32, 0
    %s35 = sadd.s32 %s34, 1
    %s36 = scalar_select %p33, %s34, %s35
    %p39 = pneg %p33
    %p40 = scmp.eq.s32.totalorder %s10, 3
    %p41 = por %p39, %p40
    %p42 = scmp.ne.s32.totalorder %s34, %s37
    %p43 = scmp.eq.s32.totalorder %s10, 0
    %p44 = por %p42, %p43
    %p45 = scmp.ne.s32.totalorder %s34, %s37
    %p46 = scmp.eq.s32.totalorder %s15, 3
    %p47 = por %p45, %p46
    %p48 = scmp.ne.s32.totalorder %s37, %s38
    %p49 = scmp.eq.s32.totalorder %s15, 0
    %p50 = por %p48, %p49
    %p51 = scmp.ne.s32.totalorder %s37, %s38
    %p52 = scmp.eq.s32.totalorder %s16, 3
    %p53 = por %p51, %p52
    %p55 = scmp.ne.s32.totalorder %s38, %s54
    %p56 = scmp.eq.s32.totalorder %s16, 0
    %p57 = por %p55, %p56
    %s58 = sadd.s32 %s18, 1
    %s59 = smul.u32 %s58, 4
    %s60 = sadd.s32 %s25, 1
    %s61 = smul.u32 %s60, 4
    %s62 = ssub.s32 %s17, %s29
    %s63 = ssub.s32 %s59, %s61
    %s64 = sor.u32 %s62, %s63
    %p65 = scmp.eq.s32.totalorder %s64, 0
    %s67 = sadd.s32 %s66, 1
    %s68 = scalar_select %p65, %s66, %s67
    %p71 = pneg %p65
    %p72 = scmp.eq.s32.totalorder %s10, 3
    %p73 = por %p71, %p72
    %p74 = scmp.ne.s32.totalorder %s66, %s69
    %p75 = scmp.eq.s32.totalorder %s10, 0
    %p76 = por %p74, %p75
    %p77 = scmp.ne.s32.totalorder %s66, %s69
    %p78 = scmp.eq.s32.totalorder %s15, 3
    %p79 = por %p77, %p78
    %p80 = scmp.ne.s32.totalorder %s69, %s70
    %p81 = scmp.eq.s32.totalorder %s15, 0
    %p82 = por %p80, %p81
    %p83 = scmp.ne.s32.totalorder %s69, %s70
    %p84 = scmp.eq.s32.totalorder %s16, 3
    %p85 = por %p83, %p84
    %p87 = scmp.ne.s32.totalorder %s70, %s86
    %p88 = scmp.eq.s32.totalorder %s16, 0
    %p89 = por %p87, %p88
    %s91 = sadd.s32 %s90, 1
    %p94 = scmp.eq.s32.totalorder %s10, 3
    %p95 = scmp.ne.s32.totalorder %s90, %s92
    %p96 = scmp.eq.s32.totalorder %s10, 0
    %p97 = por %p95, %p96
    %p98 = scmp.ne.s32.totalorder %s90, %s92
    %p99 = scmp.eq.s32.totalorder %s15, 3
    %p100 = por %p98, %p99
    %p101 = scmp.ne.s32.totalorder %s92, %s93
    %p102 = scmp.eq.s32.totalorder %s15, 0
    %p103 = por %p101, %p102
    %p104 = scmp.ne.s32.totalorder %s92, %s93
    %p105 = scmp.eq.s32.totalorder %s16, 3
    %p106 = por %p104, %p105
    %p108 = scmp.ne.s32.totalorder %s93, %s107
    %p109 = scmp.eq.s32.totalorder %s16, 0
    %p110 = por %p108, %p109
    %s112 = sadd.s32 %s111, 1
    %p115 = scmp.eq.s32.totalorder %s10, 3
    %p116 = scmp.ne.s32.totalorder %s111, %s113
    %p117 = scmp.eq.s32.totalorder %s10, 0
    %p118 = por %p116, %p117
    %p119 = scmp.ne.s32.totalorder %s111, %s113
    %p120 = scmp.eq.s32.totalorder %s15, 3
    %p121 = por %p119, %p120
    %p122 = scmp.ne.s32.totalorder %s113, %s114
    %p123 = scmp.eq.s32.totalorder %s15, 0
    %p124 = por %p122, %p123
    %p125 = scmp.ne.s32.totalorder %s113, %s114
    %p126 = scmp.eq.s32.totalorder %s16, 3
    %p127 = por %p125, %p126
    %p129 = scmp.ne.s32.totalorder %s114, %s128
    %p130 = scmp.eq.s32.totalorder %s16, 0
    %p131 = por %p129, %p130
    %s132 = ssub.s32 %s17, %s29
    %s133 = ssub.s32 %s18, %s25
    %s134 = sor.u32 %s132, %s133
    %p135 = scmp.eq.s32.totalorder %s134, 0
    %s137 = sadd.s32 %s136, 1
    %s138 = scalar_select %p135, %s136, %s137
    %p141 = pneg %p135
    %p142 = scmp.eq.s32.totalorder %s10, 3
    %p143 = por %p141, %p142
    %p144 = scmp.ne.s32.totalorder %s136, %s139
    %p145 = scmp.eq.s32.totalorder %s10, 0
    %p146 = por %p144, %p145
    %p147 = scmp.ne.s32.totalorder %s136, %s139
    %p148 = scmp.eq.s32.totalorder %s15, 3
    %p149 = por %p147, %p148
    %p150 = scmp.ne.s32.totalorder %s139, %s140
    %p151 = scmp.eq.s32.totalorder %s15, 0
    %p152 = por %p150, %p151
    %p153 = scmp.ne.s32.totalorder %s139, %s140
    %p154 = scmp.eq.s32.totalorder %s16, 3
    %p155 = por %p153, %p154
    %p157 = scmp.ne.s32.totalorder %s140, %s156
    %p158 = scmp.eq.s32.totalorder %s16, 0
    %p159 = por %p157, %p158
    %p160 = scmp.le.s32.totalorder 1, %s10
    %p161 = scmp.lt.s32.totalorder %s10, 5
    %p162 = pnand %p160, %p161
    %p163 = pneg %p162
    // Predicated region
    $region9: #{tpu_custom_call.1} parent=5 // pred_check
      _
    $region10: #{tpu_custom_call.1} parent=5 // pred_check_branch
      %165 = sbr.rel (%p162) target = $region12
    $region11: #{tpu_custom_call.1} parent=5 // pred_region
      %s166 = ssub.s32 %s10, 1
      // Predicated region
      $region13: #{tpu_custom_call.1} parent=11 // pred_check
        %p167 = pneg %p103
      $region14: #{tpu_custom_call.1} parent=11 // pred_check_branch
        %169 = sbr.rel (%p167) target = $region16
      $region15: #{tpu_custom_call.1} parent=11 // pred_region
        _
      $region16: #{tpu_custom_call.1} parent=11 // pred_fallthru
        _
      // Predicated region
      $region17: #{tpu_custom_call.1} parent=11 // pred_check
        %p170 = pneg %p124
      $region18: #{tpu_custom_call.1} parent=11 // pred_check_branch
        %172 = sbr.rel (%p170) target = $region20
      $region19: #{tpu_custom_call.1} parent=11 // pred_region
        _
      $region20: #{tpu_custom_call.1} parent=11 // pred_fallthru
        _
    $region12: #{tpu_custom_call.1} parent=5 // pred_fallthru
      _
    %p173 = scmp.lt.s32.totalorder %s10, 4
    // Predicated region
    $region21: #{tpu_custom_call.1} parent=5 // pred_check
      %p174 = pneg %p173
    $region22: #{tpu_custom_call.1} parent=5 // pred_check_branch
      %176 = sbr.rel (%p174) target = $region24
    $region23: #{tpu_custom_call.1} parent=5 // pred_region
      // Predicated region
      $region25: #{tpu_custom_call.1} parent=23 // pred_check
        %p177 = pneg %p44
      $region26: #{tpu_custom_call.1} parent=23 // pred_check_branch
        %179 = sbr.rel (%p177) target = $region28
      $region27: #{tpu_custom_call.1} parent=23 // pred_region
        %s180 = smul.u32 8, %s18
        %s181 = ssub.s32 18, %s180
        %p182 = scmp.lt.s32.totalorder %s181, 8
        %s183 = scalar_select %p182, %s181, 8
        %s184 = smul.u32 4, %s183
        %s185 = smul.u32 %s184, 3
        %p186 = scmp.lt.s32.totalorder %s17, 1
        %s187 = scalar_select %p186, %s17, 1
        %p188 = scmp.lt.s32.totalorder %s180, 17
        %s189 = scalar_select %p188, %s180, 17
        %s190 = smul.addr %s189, 3
        %s191 = smul.addr %s187, 54
        %s192 = sadd.s32 %s190, %s191
        %s193 = smul.addr %s192, 4
        %s194 = scalar_lea.vmem %s0, %s193
        %s195 = smul.u32 8, %s18
        %s196 = ssub.s32 18, %s195
        %p197 = scmp.lt.s32.totalorder %s196, 8
        %s198 = scalar_select %p197, %s196, 8
        %s199 = smul.u32 4, %s198
        %s200 = smul.u32 %s199, 3
      $region28: #{tpu_custom_call.1} parent=23 // pred_fallthru
        _
      // Predicated region
      $region29: #{tpu_custom_call.1} parent=23 // pred_check
        %p201 = pneg %p76
      $region30: #{tpu_custom_call.1} parent=23 // pred_check_branch
        %203 = sbr.rel (%p201) target = $region32
      $region31: #{tpu_custom_call.1} parent=23 // pred_region
        %s204 = sadd.s32 %s18, 1
        %s205 = smul.u32 %s204, 4
        %s206 = smul.u32 2, %s205
        %p207 = scmp.lt.s32.totalorder %s17, 1
        %s208 = scalar_select %p207, %s17, 1
        %p209 = scmp.lt.s32.totalorder %s206, 17
        %s210 = scalar_select %p209, %s206, 17
        %s211 = smul.addr %s210, 3
        %s212 = smul.addr %s208, 54
        %s213 = sadd.s32 %s211, %s212
        %s214 = smul.addr %s213, 4
        %s215 = scalar_lea.vmem %s1, %s214
        %s216 = sadd.s32 %s18, 1
        %s217 = smul.u32 %s216, 4
        %s218 = smul.u32 2, %s217
      $region32: #{tpu_custom_call.1} parent=23 // pred_fallthru
        _
    $region24: #{tpu_custom_call.1} parent=5 // pred_fallthru
      _
    %p219 = scmp.le.s32.totalorder 1, %s10
    %p220 = scmp.lt.s32.totalorder %s10, 5
    %p221 = pnand %p219, %p220
    %p222 = pneg %p221
    // Predicated region
    $region33: #{tpu_custom_call.1} parent=5 // pred_check
      _
    $region34: #{tpu_custom_call.1} parent=5 // pred_check_branch
      %224 = sbr.rel (%p221) target = $region36
    $region35: #{tpu_custom_call.1} parent=5 // pred_region
      %s225 = ssub.s32 %s10, 1
      %s226 = smul.u32 8, %s20
      %s227 = ssub.s32 18, %s226
      %p228 = scmp.lt.s32.totalorder %s227, 8
      %s229 = scalar_select %p228, %s227, 8
      %s230 = smul.u32 4, %s229
      %s231 = smul.u32 %s230, 3
      %p232 = scmp.lt.s32.totalorder %s19, 1
      %s233 = scalar_select %p232, %s19, 1
      %p234 = scmp.lt.s32.totalorder %s226, 17
      %s235 = scalar_select %p234, %s226, 17
      %s236 = smul.addr %s235, 3
      %s237 = smul.addr %s233, 54
      %s238 = sadd.s32 %s236, %s237
      %s239 = smul.addr %s238, 4
      %s240 = scalar_lea.vmem %s0, %s239
      %p241 = pneg %p50
      %p242 = pneg %p47
      %s243 = sadd.s32 %s20, 1
      %s244 = smul.u32 %s243, 4
      %s245 = smul.u32 2, %s244
      %p246 = scmp.lt.s32.totalorder %s19, 1
      %s247 = scalar_select %p246, %s19, 1
      %p248 = scmp.lt.s32.totalorder %s245, 17
      %s249 = scalar_select %p248, %s245, 17
      %s250 = smul.addr %s249, 3
      %s251 = smul.addr %s247, 54
      %s252 = sadd.s32 %s250, %s251
      %s253 = smul.addr %s252, 4
      %s254 = scalar_lea.vmem %s1, %s253
      %p255 = pneg %p82
      %p256 = pneg %p79
      %p257 = pneg %p103
      %p258 = pneg %p100
      %p259 = pneg %p124
      %p260 = pneg %p121
      %p261 = pneg %p152
      %p262 = pneg %p149
      %p263 = scmp.lt.s32.totalorder %s19, 1
      %s264 = scalar_select %p263, %s19, 1
      %p265 = scmp.lt.s32.totalorder %s20, 1
      %s266 = scalar_select %p265, %s20, 1
      %s267 = smul.addr %s266, 64
      %s268 = smul.addr %s264, 128
      %s269 = sadd.s32 %s267, %s268
      %s270 = smul.addr %s269, 8
      %s271 = scalar_lea.vmem %s4, %s270
      %s272 = smul.u32 8, %s20
      %s273 = ssub.s32 18, %s272
      %p274 = scmp.lt.s32.totalorder %s273, 8
      %s275 = scalar_select %p274, %s273, 8
      %s276 = smul.u32 4, %s275
      %s277 = smul.u32 %s276, 3
      %p278 = scmp.lt.s32.totalorder %s19, 1
      %s279 = scalar_select %p278, %s19, 1
      %p280 = scmp.lt.s32.totalorder %s272, 17
      %s281 = scalar_select %p280, %s272, 17
      %s282 = smul.addr %s281, 3
      %s283 = smul.addr %s279, 54
      %s284 = sadd.s32 %s282, %s283
      %s285 = smul.addr %s284, 4
      %s286 = scalar_lea.vmem %s0, %s285
      %s287 = smul.u32 8, %s20
      %s288 = ssub.s32 18, %s287
      %p289 = scmp.lt.s32.totalorder %s288, 8
      %s290 = scalar_select %p289, %s288, 8
      %s291 = smul.u32 4, %s290
      %s292 = smul.u32 %s291, 3
      %s293 = sadd.s32 %s20, 1
      %s294 = smul.u32 %s293, 4
      %s295 = smul.u32 2, %s294
      %p296 = scmp.lt.s32.totalorder %s19, 1
      %s297 = scalar_select %p296, %s19, 1
      %p298 = scmp.lt.s32.totalorder %s295, 17
      %s299 = scalar_select %p298, %s295, 17
      %s300 = smul.addr %s299, 3
      %s301 = smul.addr %s297, 54
      %s302 = sadd.s32 %s300, %s301
      %s303 = smul.addr %s302, 4
      %s304 = scalar_lea.vmem %s1, %s303
      %s305 = sadd.s32 %s20, 1
      %s306 = smul.u32 %s305, 4
      %s307 = smul.u32 2, %s306
      %p308 = scmp.lt.s32.totalorder %s19, 1
      %s309 = scalar_select %p308, %s19, 1
      %p310 = scmp.lt.s32.totalorder %s20, 1
      %s311 = scalar_select %p310, %s20, 1
      %s312 = smul.addr %s311, 64
      %s313 = smul.addr %s309, 128
      %s314 = sadd.s32 %s312, %s313
      %s315 = smul.addr %s314, 8
      %s316 = scalar_lea.vmem %s4, %s315
      %v318 = vld [vmem:[%s286] sm:$0xf]
      %v319 = vld [vmem:[%s286 + $0x4] sm:$0xf]
      %v320 = vld [vmem:[%s286 + $0x8] sm:$0x1]
      %v321 = vld [vmem:[%s286 + $0xc] sm:$0xf]
      %v322 = vld [vmem:[%s286 + $0x10] sm:$0xf]
      %v323 = vld [vmem:[%s286 + $0x14] sm:$0x1]
      %v324 = vld [vmem:[%s286 + $0x18] sm:$0xf]
      %v325 = vld [vmem:[%s286 + $0x1c] sm:$0xf]
      %v326 = vld [vmem:[%s286 + $0x20] sm:$0x1]
      %v327 = vld [vmem:[%s286 + $0x24] sm:$0xf]
      %v328 = vld [vmem:[%s286 + $0x28] sm:$0xf]
      %v329 = vld [vmem:[%s286 + $0x2c] sm:$0x1]
      %v330 = vld [vmem:[%s286 + $0x30] sm:$0xf]
      %v331 = vld [vmem:[%s286 + $0x34] sm:$0xf]
      %v332 = vld [vmem:[%s286 + $0x38] sm:$0x1]
      %v333 = vld [vmem:[%s286 + $0x3c] sm:$0xf]
      %v334 = vld [vmem:[%s286 + $0x40] sm:$0xf]
      %v335 = vld [vmem:[%s286 + $0x44] sm:$0x1]
      %v336 = vld [vmem:[%s286 + $0x48] sm:$0xf]
      %v337 = vld [vmem:[%s286 + $0x4c] sm:$0xf]
      %v338 = vld [vmem:[%s286 + $0x50] sm:$0x1]
      %v339 = vld [vmem:[%s286 + $0x54] sm:$0xf]
      %v340 = vld [vmem:[%s286 + $0x58] sm:$0xf]
      %v341 = vld [vmem:[%s286 + $0x5c] sm:$0x1]
      %v342 = vld [vmem:[%s304] sm:$0xf]
      %v343 = vld [vmem:[%s304 + $0x4] sm:$0xf]
      %v344 = vld [vmem:[%s304 + $0x8] sm:$0x1]
      %v345 = vld [vmem:[%s304 + $0xc] sm:$0xf]
      %v346 = vld [vmem:[%s304 + $0x10] sm:$0xf]
      %v347 = vld [vmem:[%s304 + $0x14] sm:$0x1]
      %v348 = vld [vmem:[%s3] sm:$0x1]
      %vm349 = vsmask.f32 3328
      %vm350 = vsmask.f32 7440
      %vm351 = vmor %vm349, %vm350
      %v353 = vshrl.u32 %v318, 16
      %v355 = vrot.slane %v353, 4
      %v356 = vshll.u32 %v318, 16
      %v358 = vrot.slane %v356, 5
      %v359 = vor.u32 %v355, %v358
      %v360 = vrot.slane %v359, 4
      %v362 = vshll.u32 %v319, 16
      %v364 = vrot.slane %v362, 5
      %v365 = vsel %vm351, %v360, %v364
      %v366 = vshrl.u32 %v319, 16
      %v368 = vrot.slane %v366, 4
      %v369 = vor.u32 %v368, %v364
      %v370 = vrot.slane %v369, 4
      %v372 = vshll.u32 %v320, 16
      %v374 = vrot.slane %v372, 5
      %v375 = vsel %vm351, %v370, %v374
      %v377 = vshrl.u32 %v321, 16
      %v379 = vrot.slane %v377, 4
      %v380 = vshll.u32 %v321, 16
      %v382 = vrot.slane %v380, 5
      %v383 = vor.u32 %v379, %v382
      %v384 = vrot.slane %v383, 4
      %v386 = vshll.u32 %v322, 16
      %v388 = vrot.slane %v386, 5
      %v389 = vsel %vm351, %v384, %v388
      %v390 = vshrl.u32 %v322, 16
      %v392 = vrot.slane %v390, 4
      %v393 = vor.u32 %v392, %v388
      %v394 = vrot.slane %v393, 4
      %v396 = vshll.u32 %v323, 16
      %v398 = vrot.slane %v396, 5
      %v399 = vsel %vm351, %v394, %v398
      %v401 = vshrl.u32 %v324, 16
      %v403 = vrot.slane %v401, 4
      %v404 = vshll.u32 %v324, 16
      %v406 = vrot.slane %v404, 5
      %v407 = vor.u32 %v403, %v406
      %v408 = vrot.slane %v407, 4
      %v410 = vshll.u32 %v325, 16
      %v412 = vrot.slane %v410, 5
      %v413 = vsel %vm351, %v408, %v412
      %v414 = vshrl.u32 %v325, 16
      %v416 = vrot.slane %v414, 4
      %v417 = vor.u32 %v416, %v412
      %v418 = vrot.slane %v417, 4
      %v420 = vshll.u32 %v326, 16
      %v422 = vrot.slane %v420, 5
      %v423 = vsel %vm351, %v418, %v422
      %v425 = vshrl.u32 %v327, 16
      %v427 = vrot.slane %v425, 4
      %v428 = vshll.u32 %v327, 16
      %v430 = vrot.slane %v428, 5
      %v431 = vor.u32 %v427, %v430
      %v432 = vrot.slane %v431, 4
      %v434 = vshll.u32 %v328, 16
      %v436 = vrot.slane %v434, 5
      %v437 = vsel %vm351, %v432, %v436
      %v438 = vshrl.u32 %v328, 16
      %v440 = vrot.slane %v438, 4
      %v441 = vor.u32 %v440, %v436
      %v442 = vrot.slane %v441, 4
      %v444 = vshll.u32 %v329, 16
      %v446 = vrot.slane %v444, 5
      %v447 = vsel %vm351, %v442, %v446
      %v449 = vshrl.u32 %v330, 16
      %v451 = vrot.slane %v449, 4
      %v452 = vshll.u32 %v330, 16
      %v454 = vrot.slane %v452, 5
      %v455 = vor.u32 %v451, %v454
      %v456 = vrot.slane %v455, 4
      %v458 = vshll.u32 %v331, 16
      %v460 = vrot.slane %v458, 5
      %v461 = vsel %vm351, %v456, %v460
      %v462 = vshrl.u32 %v331, 16
      %v464 = vrot.slane %v462, 4
      %v465 = vor.u32 %v464, %v460
      %v466 = vrot.slane %v465, 4
      %v468 = vshll.u32 %v332, 16
      %v470 = vrot.slane %v468, 5
      %v471 = vsel %vm351, %v466, %v470
      %v473 = vshrl.u32 %v333, 16
      %v475 = vrot.slane %v473, 4
      %v476 = vshll.u32 %v333, 16
      %v478 = vrot.slane %v476, 5
      %v479 = vor.u32 %v475, %v478
      %v480 = vrot.slane %v479, 4
      %v482 = vshll.u32 %v334, 16
      %v484 = vrot.slane %v482, 5
      %v485 = vsel %vm351, %v480, %v484
      %v486 = vshrl.u32 %v334, 16
      %v488 = vrot.slane %v486, 4
      %v489 = vor.u32 %v488, %v484
      %v490 = vrot.slane %v489, 4
      %v492 = vshll.u32 %v335, 16
      %v494 = vrot.slane %v492, 5
      %v495 = vsel %vm351, %v490, %v494
      %v497 = vshrl.u32 %v336, 16
      %v499 = vrot.slane %v497, 4
      %v500 = vshll.u32 %v336, 16
      %v502 = vrot.slane %v500, 5
      %v503 = vor.u32 %v499, %v502
      %v504 = vrot.slane %v503, 4
      %v506 = vshll.u32 %v337, 16
      %v508 = vrot.slane %v506, 5
      %v509 = vsel %vm351, %v504, %v508
      %v510 = vshrl.u32 %v337, 16
      %v512 = vrot.slane %v510, 4
      %v513 = vor.u32 %v512, %v508
      %v514 = vrot.slane %v513, 4
      %v516 = vshll.u32 %v338, 16
      %v518 = vrot.slane %v516, 5
      %v519 = vsel %vm351, %v514, %v518
      %v521 = vshrl.u32 %v339, 16
      %v523 = vrot.slane %v521, 4
      %v524 = vshll.u32 %v339, 16
      %v526 = vrot.slane %v524, 5
      %v527 = vor.u32 %v523, %v526
      %v528 = vrot.slane %v527, 4
      %v530 = vshll.u32 %v340, 16
      %v532 = vrot.slane %v530, 5
      %v533 = vsel %vm351, %v528, %v532
      %v534 = vshrl.u32 %v340, 16
      %v536 = vrot.slane %v534, 4
      %v537 = vor.u32 %v536, %v532
      %v538 = vrot.slane %v537, 4
      %v540 = vshll.u32 %v341, 16
      %v542 = vrot.slane %v540, 5
      %v543 = vsel %vm351, %v538, %v542
      %vm568 = vcmask 1042432
      %vm569 = vcmask 1046532
      %vm570 = vmor %vm568, %vm569
      %v571 = vrot.slane %v318, 5
      %v572 = vrot.slane %v571, 4
      %v573 = vrot.slane %v319, 5
      %v574 = vsel %vm570, %v572, %v573
      %v575 = vrot.slane %v573, 4
      %v576 = vrot.slane %v320, 5
      %v577 = vsel %vm570, %v575, %v576
      %v578 = vrot.slane %v321, 5
      %v579 = vrot.slane %v578, 4
      %v580 = vrot.slane %v322, 5
      %v581 = vsel %vm570, %v579, %v580
      %v582 = vrot.slane %v580, 4
      %v583 = vrot.slane %v323, 5
      %v584 = vsel %vm570, %v582, %v583
      %v585 = vrot.slane %v324, 5
      %v586 = vrot.slane %v585, 4
      %v587 = vrot.slane %v325, 5
      %v588 = vsel %vm570, %v586, %v587
      %v589 = vrot.slane %v587, 4
      %v590 = vrot.slane %v326, 5
      %v591 = vsel %vm570, %v589, %v590
      %v592 = vrot.slane %v327, 5
      %v593 = vrot.slane %v592, 4
      %v594 = vrot.slane %v328, 5
      %v595 = vsel %vm570, %v593, %v594
      %v596 = vrot.slane %v594, 4
      %v597 = vrot.slane %v329, 5
      %v598 = vsel %vm570, %v596, %v597
      %v599 = vrot.slane %v330, 5
      %v600 = vrot.slane %v599, 4
      %v601 = vrot.slane %v331, 5
      %v602 = vsel %vm570, %v600, %v601
      %v603 = vrot.slane %v601, 4
      %v604 = vrot.slane %v332, 5
      %v605 = vsel %vm570, %v603, %v604
      %v606 = vrot.slane %v333, 5
      %v607 = vrot.slane %v606, 4
      %v608 = vrot.slane %v334, 5
      %v609 = vsel %vm570, %v607, %v608
      %v610 = vrot.slane %v608, 4
      %v611 = vrot.slane %v335, 5
      %v612 = vsel %vm570, %v610, %v611
      %v613 = vrot.slane %v336, 5
      %v614 = vrot.slane %v613, 4
      %v615 = vrot.slane %v337, 5
      %v616 = vsel %vm570, %v614, %v615
      %v617 = vrot.slane %v615, 4
      %v618 = vrot.slane %v338, 5
      %v619 = vsel %vm570, %v617, %v618
      %v620 = vrot.slane %v339, 5
      %v621 = vrot.slane %v620, 4
      %v622 = vrot.slane %v340, 5
      %v623 = vsel %vm570, %v621, %v622
      %v624 = vrot.slane %v622, 4
      %v625 = vrot.slane %v341, 5
      %v626 = vsel %vm570, %v624, %v625
      %v628 = vshrl.u32 %v342, 16
      %v630 = vrot.slane %v628, 4
      %v631 = vshll.u32 %v342, 16
      %v633 = vrot.slane %v631, 5
      %v634 = vor.u32 %v630, %v633
      %v635 = vrot.slane %v634, 4
      %v637 = vshll.u32 %v343, 16
      %v639 = vrot.slane %v637, 5
      %v640 = vsel %vm351, %v635, %v639
      %v641 = vshrl.u32 %v343, 16
      %v643 = vrot.slane %v641, 4
      %v644 = vor.u32 %v643, %v639
      %v645 = vrot.slane %v644, 4
      %v647 = vshll.u32 %v344, 16
      %v649 = vrot.slane %v647, 5
      %v650 = vsel %vm351, %v645, %v649
      %v654 = vrot.slane %v342, 5
      %v655 = vrot.slane %v654, 4
      %v656 = vrot.slane %v343, 5
      %v657 = vsel %vm570, %v655, %v656
      %v658 = vrot.slane %v656, 4
      %v659 = vrot.slane %v344, 5
      %v660 = vsel %vm570, %v658, %v659
      %v662 = vshrl.u32 %v345, 16
      %v664 = vrot.slane %v662, 4
      %v665 = vshll.u32 %v345, 16
      %v667 = vrot.slane %v665, 5
      %v668 = vor.u32 %v664, %v667
      %v669 = vrot.slane %v668, 4
      %v671 = vshll.u32 %v346, 16
      %v673 = vrot.slane %v671, 5
      %v674 = vsel %vm351, %v669, %v673
      %v675 = vshrl.u32 %v346, 16
      %v677 = vrot.slane %v675, 4
      %v678 = vor.u32 %v677, %v673
      %v679 = vrot.slane %v678, 4
      %v681 = vshll.u32 %v347, 16
      %v683 = vrot.slane %v681, 5
      %v684 = vsel %vm351, %v679, %v683
      %v688 = vrot.slane %v345, 5
      %v689 = vrot.slane %v688, 4
      %v690 = vrot.slane %v346, 5
      %v691 = vsel %vm570, %v689, %v690
      %v692 = vrot.slane %v690, 4
      %v693 = vrot.slane %v347, 5
      %v694 = vsel %vm570, %v692, %v693
      %v695 = vunpack.c.l.b16 %v318
      %v696 = vunpack.c.l.b16 %v319
      %v697 = vunpack.c.l.b16 %v321
      %v698 = vunpack.c.l.b16 %v322
      %v699 = vunpack.c.l.b16 %v324
      %v700 = vunpack.c.l.b16 %v325
      %v701 = vunpack.c.l.b16 %v327
      %v702 = vunpack.c.l.b16 %v328
      %v703 = vunpack.c.l.b16 %v330
      %v704 = vunpack.c.l.b16 %v331
      %v705 = vunpack.c.l.b16 %v333
      %v706 = vunpack.c.l.b16 %v334
      %v707 = vunpack.c.l.b16 %v336
      %v708 = vunpack.c.l.b16 %v337
      %v709 = vunpack.c.l.b16 %v339
      %v710 = vunpack.c.l.b16 %v340
      %v711 = vpack.c.b16 %v696, %v695
      %v712 = vpack.c.b16 %v698, %v697
      %v713 = vpack.c.b16 %v700, %v699
      %v714 = vpack.c.b16 %v702, %v701
      %v715 = vpack.c.b16 %v704, %v703
      %v716 = vpack.c.b16 %v706, %v705
      %v717 = vpack.c.b16 %v708, %v707
      %v718 = vpack.c.b16 %v710, %v709
      %v719 = vunpack.c.l.b16 %v365
      %v720 = vunpack.c.l.b16 %v375
      %v721 = vunpack.c.l.b16 %v389
      %v722 = vunpack.c.l.b16 %v399
      %v723 = vunpack.c.l.b16 %v413
      %v724 = vunpack.c.l.b16 %v423
      %v725 = vunpack.c.l.b16 %v437
      %v726 = vunpack.c.l.b16 %v447
      %v727 = vunpack.c.l.b16 %v461
      %v728 = vunpack.c.l.b16 %v471
      %v729 = vunpack.c.l.b16 %v485
      %v730 = vunpack.c.l.b16 %v495
      %v731 = vunpack.c.l.b16 %v509
      %v732 = vunpack.c.l.b16 %v519
      %v733 = vunpack.c.l.b16 %v533
      %v734 = vunpack.c.l.b16 %v543
      %v735 = vpack.c.b16 %v720, %v719
      %v736 = vpack.c.b16 %v722, %v721
      %v737 = vpack.c.b16 %v724, %v723
      %v738 = vpack.c.b16 %v726, %v725
      %v739 = vpack.c.b16 %v728, %v727
      %v740 = vpack.c.b16 %v730, %v729
      %v741 = vpack.c.b16 %v732, %v731
      %v742 = vpack.c.b16 %v734, %v733
      %743 = vrot.lane.b32.xlu0 %v735, 4
      %v744 = vpop.permute.xlu0 %743
      %745 = vrot.lane.b32.xlu0 %v736, 4
      %v746 = vpop.permute.xlu0 %745
      %747 = vrot.lane.b32.xlu0 %v737, 4
      %v748 = vpop.permute.xlu0 %747
      %749 = vrot.lane.b32.xlu0 %v738, 4
      %v750 = vpop.permute.xlu0 %749
      %751 = vrot.lane.b32.xlu0 %v739, 4
      %v752 = vpop.permute.xlu0 %751
      %753 = vrot.lane.b32.xlu0 %v740, 4
      %v754 = vpop.permute.xlu0 %753
      %755 = vrot.lane.b32.xlu0 %v741, 4
      %v756 = vpop.permute.xlu0 %755
      %757 = vrot.lane.b32.xlu0 %v742, 4
      %v758 = vpop.permute.xlu0 %757
      %v759 = vunpack.c.l.b16 %v342
      %v760 = vunpack.c.l.b16 %v343
      %v761 = vpack.c.b16 %v760, %v759
      %762 = vrot.lane.b32.xlu0 %v712, 8
      %v763 = vpop.permute.xlu0 %762
      %764 = vrot.lane.b32.xlu0 %v713, 8
      %v765 = vpop.permute.xlu0 %764
      %766 = vrot.lane.b32.xlu0 %v714, 8
      %v767 = vpop.permute.xlu0 %766
      %768 = vrot.lane.b32.xlu0 %v715, 8
      %v769 = vpop.permute.xlu0 %768
      %770 = vrot.lane.b32.xlu0 %v716, 8
      %v771 = vpop.permute.xlu0 %770
      %772 = vrot.lane.b32.xlu0 %v717, 8
      %v773 = vpop.permute.xlu0 %772
      %774 = vrot.lane.b32.xlu0 %v718, 8
      %v775 = vpop.permute.xlu0 %774
      %776 = vrot.lane.b32.xlu0 %v761, 8
      %v777 = vpop.permute.xlu0 %776
      %v778 = vunpack.c.l.b16 %v640
      %v779 = vunpack.c.l.b16 %v650
      %v780 = vpack.c.b16 %v779, %v778
      %781 = vrot.lane.b32.xlu0 %v736, 12
      %v782 = vpop.permute.xlu0 %781
      %783 = vrot.lane.b32.xlu0 %v737, 12
      %v784 = vpop.permute.xlu0 %783
      %785 = vrot.lane.b32.xlu0 %v738, 12
      %v786 = vpop.permute.xlu0 %785
      %787 = vrot.lane.b32.xlu0 %v739, 12
      %v788 = vpop.permute.xlu0 %787
      %789 = vrot.lane.b32.xlu0 %v740, 12
      %v790 = vpop.permute.xlu0 %789
      %791 = vrot.lane.b32.xlu0 %v741, 12
      %v792 = vpop.permute.xlu0 %791
      %793 = vrot.lane.b32.xlu0 %v742, 12
      %v794 = vpop.permute.xlu0 %793
      %795 = vrot.lane.b32.xlu0 %v780, 12
      %v796 = vpop.permute.xlu0 %795
      %vm797 = vcmask 31744
      %v800 = vsel %vm797, %v711, %v744
      %v803 = vsel %vm797, %v712, %v746
      %v806 = vsel %vm797, %v713, %v748
      %v809 = vsel %vm797, %v714, %v750
      %v812 = vsel %vm797, %v715, %v752
      %v815 = vsel %vm797, %v716, %v754
      %v818 = vsel %vm797, %v717, %v756
      %v821 = vsel %vm797, %v718, %v758
      %vm822 = vcmask 64512
      %v824 = vsel %vm822, %v800, %v763
      %v826 = vsel %vm822, %v803, %v765
      %v828 = vsel %vm822, %v806, %v767
      %v830 = vsel %vm822, %v809, %v769
      %v832 = vsel %vm822, %v812, %v771
      %v834 = vsel %vm822, %v815, %v773
      %v836 = vsel %vm822, %v818, %v775
      %v838 = vsel %vm822, %v821, %v777
      %vm839 = vcmask 97280
      %v841 = vsel %vm839, %v824, %v782
      %v843 = vsel %vm839, %v826, %v784
      %v845 = vsel %vm839, %v828, %v786
      %v847 = vsel %vm839, %v830, %v788
      %v849 = vsel %vm839, %v832, %v790
      %v851 = vsel %vm839, %v834, %v792
      %v853 = vsel %vm839, %v836, %v794
      %v855 = vsel %vm839, %v838, %v796
      %v856 = vld [vmem:[%s2] sm:$0xf]
      %v857 = vld [vmem:[%s2 + $0x4] sm:$0xf]
      %v859 = vperm.slane %v348, 0
      %v863 = vunpack.c.l.b16 %v856
      %v864 = vunpack.c.l.b16 %v857
      %v865 = vpack.c.b16 %v864, %v863
      %vm867 = vcmask 130048
      %v868 = vsel %vm867, %v841, 0
      %v870 = vsel %vm867, %v843, 0
      %v872 = vsel %vm867, %v845, 0
      %v874 = vsel %vm867, %v847, 0
      %v876 = vsel %vm867, %v849, 0
      %v878 = vsel %vm867, %v851, 0
      %v880 = vsel %vm867, %v853, 0
      %v882 = vsel %vm867, %v855, 0
      %884 = vmatpush.bf16.msra.mxu0 0
      %885 = vmatpush.bf16.msra.mxu0 0
      %886 = vmatpush.bf16.msra.mxu0 0
      %887 = vmatpush.bf16.msra.mxu0 0
      %888 = vmatpush.bf16.msra.mxu0 0
      %889 = vmatpush.bf16.msra.mxu0 0
      %890 = vmatpush.bf16.msra.mxu0 0
      %891 = vmatpush.bf16.msra.mxu0 %v865
      %892 = vmatmul.bf16.gmra.mxu0 %v868
      %v893 = vpop.f32.mrf.mxu0
      %v894 = vadd.f32 %v859, %v893
      %v895 = vpop.f32.mrf.mxu0
      %v896 = vadd.f32 %v859, %v895
      %897 = vmatmul.bf16.gmra.mxu0 %v870
      %v898 = vpop.f32.mrf.mxu0
      %v899 = vadd.f32 %v859, %v898
      %v900 = vpop.f32.mrf.mxu0
      %v901 = vadd.f32 %v859, %v900
      %902 = vmatmul.bf16.gmra.mxu0 %v872
      %v903 = vpop.f32.mrf.mxu0
      %v904 = vadd.f32 %v859, %v903
      %v905 = vpop.f32.mrf.mxu0
      %v906 = vadd.f32 %v859, %v905
      %907 = vmatmul.bf16.gmra.mxu0 %v874
      %v908 = vpop.f32.mrf.mxu0
      %v909 = vadd.f32 %v859, %v908
      %v910 = vpop.f32.mrf.mxu0
      %v911 = vadd.f32 %v859, %v910
      %912 = vmatmul.bf16.gmra.mxu0 %v876
      %v913 = vpop.f32.mrf.mxu0
      %v914 = vadd.f32 %v859, %v913
      %v915 = vpop.f32.mrf.mxu0
      %v916 = vadd.f32 %v859, %v915
      %917 = vmatmul.bf16.gmra.mxu0 %v878
      %v918 = vpop.f32.mrf.mxu0
      %v919 = vadd.f32 %v859, %v918
      %v920 = vpop.f32.mrf.mxu0
      %v921 = vadd.f32 %v859, %v920
      %922 = vmatmul.bf16.gmra.mxu0 %v880
      %v923 = vpop.f32.mrf.mxu0
      %v924 = vadd.f32 %v859, %v923
      %v925 = vpop.f32.mrf.mxu0
      %v926 = vadd.f32 %v859, %v925
      %927 = vmatmul.bf16.gmra.mxu0 %v882
      %v928 = vpop.f32.mrf.mxu0
      %v929 = vadd.f32 %v859, %v928
      %v930 = vpop.f32.mrf.mxu0
      %v931 = vadd.f32 %v859, %v930
      %932 = vdwg.mxu0
      %933 = vst.msk [vmem:[%s316] sm:$0xff] %vm797, %v894
      %934 = vst.msk [vmem:[%s316 + $0x8] sm:$0xff] %vm797, %v896
      %935 = vst.msk [vmem:[%s316 + $0x10] sm:$0xff] %vm797, %v899
      %936 = vst.msk [vmem:[%s316 + $0x18] sm:$0xff] %vm797, %v901
      %937 = vst.msk [vmem:[%s316 + $0x20] sm:$0xff] %vm797, %v904
      %938 = vst.msk [vmem:[%s316 + $0x28] sm:$0xff] %vm797, %v906
      %939 = vst.msk [vmem:[%s316 + $0x30] sm:$0xff] %vm797, %v909
      %940 = vst.msk [vmem:[%s316 + $0x38] sm:$0xff] %vm797, %v911
      %941 = vst.msk [vmem:[%s316 + $0x40] sm:$0xff] %vm797, %v914
      %942 = vst.msk [vmem:[%s316 + $0x48] sm:$0xff] %vm797, %v916
      %943 = vst.msk [vmem:[%s316 + $0x50] sm:$0xff] %vm797, %v919
      %944 = vst.msk [vmem:[%s316 + $0x58] sm:$0xff] %vm797, %v921
      %945 = vst.msk [vmem:[%s316 + $0x60] sm:$0xff] %vm797, %v924
      %946 = vst.msk [vmem:[%s316 + $0x68] sm:$0xff] %vm797, %v926
      %947 = vst.msk [vmem:[%s316 + $0x70] sm:$0xff] %vm797, %v929
      %948 = vst.msk [vmem:[%s316 + $0x78] sm:$0xff] %vm797, %v931
      %v949 = vunpack.c.l.b16 %v574
      %v950 = vunpack.c.l.b16 %v577
      %v951 = vunpack.c.l.b16 %v581
      %v952 = vunpack.c.l.b16 %v584
      %v953 = vunpack.c.l.b16 %v588
      %v954 = vunpack.c.l.b16 %v591
      %v955 = vunpack.c.l.b16 %v595
      %v956 = vunpack.c.l.b16 %v598
      %v957 = vunpack.c.l.b16 %v602
      %v958 = vunpack.c.l.b16 %v605
      %v959 = vunpack.c.l.b16 %v609
      %v960 = vunpack.c.l.b16 %v612
      %v961 = vunpack.c.l.b16 %v616
      %v962 = vunpack.c.l.b16 %v619
      %v963 = vunpack.c.l.b16 %v623
      %v964 = vunpack.c.l.b16 %v626
      %v965 = vpack.c.b16 %v950, %v949
      %v966 = vpack.c.b16 %v952, %v951
      %v967 = vpack.c.b16 %v954, %v953
      %v968 = vpack.c.b16 %v956, %v955
      %v969 = vpack.c.b16 %v958, %v957
      %v970 = vpack.c.b16 %v960, %v959
      %v971 = vpack.c.b16 %v962, %v961
      %v972 = vpack.c.b16 %v964, %v963
      %973 = vrot.lane.b32.xlu0 %v965, 4
      %v974 = vpop.permute.xlu0 %973
      %975 = vrot.lane.b32.xlu0 %v966, 4
      %v976 = vpop.permute.xlu0 %975
      %977 = vrot.lane.b32.xlu0 %v967, 4
      %v978 = vpop.permute.xlu0 %977
      %979 = vrot.lane.b32.xlu0 %v968, 4
      %v980 = vpop.permute.xlu0 %979
      %981 = vrot.lane.b32.xlu0 %v969, 4
      %v982 = vpop.permute.xlu0 %981
      %983 = vrot.lane.b32.xlu0 %v970, 4
      %v984 = vpop.permute.xlu0 %983
      %985 = vrot.lane.b32.xlu0 %v971, 4
      %v986 = vpop.permute.xlu0 %985
      %987 = vrot.lane.b32.xlu0 %v972, 4
      %v988 = vpop.permute.xlu0 %987
      %989 = vrot.lane.b32.xlu0 %v736, 8
      %v990 = vpop.permute.xlu0 %989
      %991 = vrot.lane.b32.xlu0 %v737, 8
      %v992 = vpop.permute.xlu0 %991
      %993 = vrot.lane.b32.xlu0 %v738, 8
      %v994 = vpop.permute.xlu0 %993
      %995 = vrot.lane.b32.xlu0 %v739, 8
      %v996 = vpop.permute.xlu0 %995
      %997 = vrot.lane.b32.xlu0 %v740, 8
      %v998 = vpop.permute.xlu0 %997
      %999 = vrot.lane.b32.xlu0 %v741, 8
      %v1000 = vpop.permute.xlu0 %999
      %1001 = vrot.lane.b32.xlu0 %v742, 8
      %v1002 = vpop.permute.xlu0 %1001
      %1003 = vrot.lane.b32.xlu0 %v780, 8
      %v1004 = vpop.permute.xlu0 %1003
      %v1005 = vunpack.c.l.b16 %v657
      %v1006 = vunpack.c.l.b16 %v660
      %v1007 = vpack.c.b16 %v1006, %v1005
      %1008 = vrot.lane.b32.xlu0 %v966, 12
      %v1009 = vpop.permute.xlu0 %1008
      %1010 = vrot.lane.b32.xlu0 %v967, 12
      %v1011 = vpop.permute.xlu0 %1010
      %1012 = vrot.lane.b32.xlu0 %v968, 12
      %v1013 = vpop.permute.xlu0 %1012
      %1014 = vrot.lane.b32.xlu0 %v969, 12
      %v1015 = vpop.permute.xlu0 %1014
      %1016 = vrot.lane.b32.xlu0 %v970, 12
      %v1017 = vpop.permute.xlu0 %1016
      %1018 = vrot.lane.b32.xlu0 %v971, 12
      %v1019 = vpop.permute.xlu0 %1018
      %1020 = vrot.lane.b32.xlu0 %v972, 12
      %v1021 = vpop.permute.xlu0 %1020
      %1022 = vrot.lane.b32.xlu0 %v1007, 12
      %v1023 = vpop.permute.xlu0 %1022
      %v1026 = vsel %vm797, %v735, %v974
      %v1029 = vsel %vm797, %v736, %v976
      %v1032 = vsel %vm797, %v737, %v978
      %v1035 = vsel %vm797, %v738, %v980
      %v1038 = vsel %vm797, %v739, %v982
      %v1041 = vsel %vm797, %v740, %v984
      %v1044 = vsel %vm797, %v741, %v986
      %v1047 = vsel %vm797, %v742, %v988
      %v1049 = vsel %vm822, %v1026, %v990
      %v1051 = vsel %vm822, %v1029, %v992
      %v1053 = vsel %vm822, %v1032, %v994
      %v1055 = vsel %vm822, %v1035, %v996
      %v1057 = vsel %vm822, %v1038, %v998
      %v1059 = vsel %vm822, %v1041, %v1000
      %v1061 = vsel %vm822, %v1044, %v1002
      %v1063 = vsel %vm822, %v1047, %v1004
      %v1065 = vsel %vm839, %v1049, %v1009
      %v1067 = vsel %vm839, %v1051, %v1011
      %v1069 = vsel %vm839, %v1053, %v1013
      %v1071 = vsel %vm839, %v1055, %v1015
      %v1073 = vsel %vm839, %v1057, %v1017
      %v1075 = vsel %vm839, %v1059, %v1019
      %v1077 = vsel %vm839, %v1061, %v1021
      %v1079 = vsel %vm839, %v1063, %v1023
      %s1080 = scalar_lea.vmem %s2, 8
      %v1081 = vld [vmem:[%s1080] sm:$0xf]
      %v1082 = vld [vmem:[%s1080 + $0x4] sm:$0xf]
      %v1085 = vunpack.c.l.b16 %v1081
      %v1086 = vunpack.c.l.b16 %v1082
      %v1087 = vpack.c.b16 %v1086, %v1085
      %v1089 = vsel %vm867, %v1065, 0
      %v1091 = vsel %vm867, %v1067, 0
      %v1093 = vsel %vm867, %v1069, 0
      %v1095 = vsel %vm867, %v1071, 0
      %v1097 = vsel %vm867, %v1073, 0
      %v1099 = vsel %vm867, %v1075, 0
      %v1101 = vsel %vm867, %v1077, 0
      %v1103 = vsel %vm867, %v1079, 0
      %1105 = vmatpush.bf16.msra.mxu0 0
      %1106 = vmatpush.bf16.msra.mxu0 0
      %1107 = vmatpush.bf16.msra.mxu0 0
      %1108 = vmatpush.bf16.msra.mxu0 0
      %1109 = vmatpush.bf16.msra.mxu0 0
      %1110 = vmatpush.bf16.msra.mxu0 0
      %1111 = vmatpush.bf16.msra.mxu0 0
      %1112 = vmatpush.bf16.msra.mxu0 %v1087
      %1113 = vmatmul.bf16.gmra.mxu0 %v1089
      %v1114 = vpop.f32.mrf.mxu0
      %v1115 = vadd.f32 %v859, %v1114
      %v1116 = vpop.f32.mrf.mxu0
      %v1117 = vadd.f32 %v859, %v1116
      %1118 = vmatmul.bf16.gmra.mxu0 %v1091
      %v1119 = vpop.f32.mrf.mxu0
      %v1120 = vadd.f32 %v859, %v1119
      %v1121 = vpop.f32.mrf.mxu0
      %v1122 = vadd.f32 %v859, %v1121
      %1123 = vmatmul.bf16.gmra.mxu0 %v1093
      %v1124 = vpop.f32.mrf.mxu0
      %v1125 = vadd.f32 %v859, %v1124
      %v1126 = vpop.f32.mrf.mxu0
      %v1127 = vadd.f32 %v859, %v1126
      %1128 = vmatmul.bf16.gmra.mxu0 %v1095
      %v1129 = vpop.f32.mrf.mxu0
      %v1130 = vadd.f32 %v859, %v1129
      %v1131 = vpop.f32.mrf.mxu0
      %v1132 = vadd.f32 %v859, %v1131
      %1133 = vmatmul.bf16.gmra.mxu0 %v1097
      %v1134 = vpop.f32.mrf.mxu0
      %v1135 = vadd.f32 %v859, %v1134
      %v1136 = vpop.f32.mrf.mxu0
      %v1137 = vadd.f32 %v859, %v1136
      %1138 = vmatmul.bf16.gmra.mxu0 %v1099
      %v1139 = vpop.f32.mrf.mxu0
      %v1140 = vadd.f32 %v859, %v1139
      %v1141 = vpop.f32.mrf.mxu0
      %v1142 = vadd.f32 %v859, %v1141
      %1143 = vmatmul.bf16.gmra.mxu0 %v1101
      %v1144 = vpop.f32.mrf.mxu0
      %v1145 = vadd.f32 %v859, %v1144
      %v1146 = vpop.f32.mrf.mxu0
      %v1147 = vadd.f32 %v859, %v1146
      %1148 = vmatmul.bf16.gmra.mxu0 %v1103
      %v1149 = vpop.f32.mrf.mxu0
      %v1150 = vadd.f32 %v859, %v1149
      %v1151 = vpop.f32.mrf.mxu0
      %v1152 = vadd.f32 %v859, %v1151
      %1153 = vdwg.mxu0
      %s1154 = scalar_lea.vmem %s316, 128
      %1155 = vst.msk [vmem:[%s1154] sm:$0xff] %vm797, %v1115
      %1156 = vst.msk [vmem:[%s1154 + $0x8] sm:$0xff] %vm797, %v1117
      %1157 = vst.msk [vmem:[%s1154 + $0x10] sm:$0xff] %vm797, %v1120
      %1158 = vst.msk [vmem:[%s1154 + $0x18] sm:$0xff] %vm797, %v1122
      %1159 = vst.msk [vmem:[%s1154 + $0x20] sm:$0xff] %vm797, %v1125
      %1160 = vst.msk [vmem:[%s1154 + $0x28] sm:$0xff] %vm797, %v1127
      %1161 = vst.msk [vmem:[%s1154 + $0x30] sm:$0xff] %vm797, %v1130
      %1162 = vst.msk [vmem:[%s1154 + $0x38] sm:$0xff] %vm797, %v1132
      %1163 = vst.msk [vmem:[%s1154 + $0x40] sm:$0xff] %vm797, %v1135
      %1164 = vst.msk [vmem:[%s1154 + $0x48] sm:$0xff] %vm797, %v1137
      %1165 = vst.msk [vmem:[%s1154 + $0x50] sm:$0xff] %vm797, %v1140
      %1166 = vst.msk [vmem:[%s1154 + $0x58] sm:$0xff] %vm797, %v1142
      %1167 = vst.msk [vmem:[%s1154 + $0x60] sm:$0xff] %vm797, %v1145
      %1168 = vst.msk [vmem:[%s1154 + $0x68] sm:$0xff] %vm797, %v1147
      %1169 = vst.msk [vmem:[%s1154 + $0x70] sm:$0xff] %vm797, %v1150
      %1170 = vst.msk [vmem:[%s1154 + $0x78] sm:$0xff] %vm797, %v1152
      %1171 = vrot.lane.b32.xlu0 %v780, 4
      %v1172 = vpop.permute.xlu0 %1171
      %v1173 = vunpack.c.l.b16 %v345
      %v1174 = vunpack.c.l.b16 %v346
      %v1175 = vpack.c.b16 %v1174, %v1173
      %1176 = vrot.lane.b32.xlu0 %v1175, 8
      %v1177 = vpop.permute.xlu0 %1176
      %v1178 = vunpack.c.l.b16 %v674
      %v1179 = vunpack.c.l.b16 %v684
      %v1180 = vpack.c.b16 %v1179, %v1178
      %1181 = vrot.lane.b32.xlu0 %v1180, 12
      %v1182 = vpop.permute.xlu0 %1181
      %v1185 = vsel %vm797, %v761, %v1172
      %v1187 = vsel %vm822, %v1185, %v1177
      %v1189 = vsel %vm839, %v1187, %v1182
      %s1190 = scalar_lea.vmem %s2, 16
      %v1191 = vld [vmem:[%s1190] sm:$0xf]
      %v1192 = vld [vmem:[%s1190 + $0x4] sm:$0xf]
      %v1195 = vunpack.c.l.b16 %v1191
      %v1196 = vunpack.c.l.b16 %v1192
      %v1197 = vpack.c.b16 %v1196, %v1195
      %v1199 = vsel %vm867, %v1189, 0
      %1201 = vmatpush.bf16.msra.mxu0 0
      %1202 = vmatpush.bf16.msra.mxu0 0
      %1203 = vmatpush.bf16.msra.mxu0 0
      %1204 = vmatpush.bf16.msra.mxu0 0
      %1205 = vmatpush.bf16.msra.mxu0 0
      %1206 = vmatpush.bf16.msra.mxu0 0
      %1207 = vmatpush.bf16.msra.mxu0 0
      %1208 = vmatpush.bf16.msra.mxu0 %v1197
      %1209 = vmatmul.bf16.gmra.mxu0 %v870
      %v1210 = vpop.f32.mrf.mxu0
      %v1211 = vadd.f32 %v859, %v1210
      %v1212 = vpop.f32.mrf.mxu0
      %v1213 = vadd.f32 %v859, %v1212
      %1214 = vmatmul.bf16.gmra.mxu0 %v872
      %v1215 = vpop.f32.mrf.mxu0
      %v1216 = vadd.f32 %v859, %v1215
      %v1217 = vpop.f32.mrf.mxu0
      %v1218 = vadd.f32 %v859, %v1217
      %1219 = vmatmul.bf16.gmra.mxu0 %v874
      %v1220 = vpop.f32.mrf.mxu0
      %v1221 = vadd.f32 %v859, %v1220
      %v1222 = vpop.f32.mrf.mxu0
      %v1223 = vadd.f32 %v859, %v1222
      %1224 = vmatmul.bf16.gmra.mxu0 %v876
      %v1225 = vpop.f32.mrf.mxu0
      %v1226 = vadd.f32 %v859, %v1225
      %v1227 = vpop.f32.mrf.mxu0
      %v1228 = vadd.f32 %v859, %v1227
      %1229 = vmatmul.bf16.gmra.mxu0 %v878
      %v1230 = vpop.f32.mrf.mxu0
      %v1231 = vadd.f32 %v859, %v1230
      %v1232 = vpop.f32.mrf.mxu0
      %v1233 = vadd.f32 %v859, %v1232
      %1234 = vmatmul.bf16.gmra.mxu0 %v880
      %v1235 = vpop.f32.mrf.mxu0
      %v1236 = vadd.f32 %v859, %v1235
      %v1237 = vpop.f32.mrf.mxu0
      %v1238 = vadd.f32 %v859, %v1237
      %1239 = vmatmul.bf16.gmra.mxu0 %v882
      %v1240 = vpop.f32.mrf.mxu0
      %v1241 = vadd.f32 %v859, %v1240
      %v1242 = vpop.f32.mrf.mxu0
      %v1243 = vadd.f32 %v859, %v1242
      %1244 = vmatmul.bf16.gmra.mxu0 %v1199
      %v1245 = vpop.f32.mrf.mxu0
      %v1246 = vadd.f32 %v859, %v1245
      %v1247 = vpop.f32.mrf.mxu0
      %v1248 = vadd.f32 %v859, %v1247
      %1249 = vdwg.mxu0
      %s1250 = scalar_lea.vmem %s316, 256
      %1251 = vst.msk [vmem:[%s1250] sm:$0xff] %vm797, %v1211
      %1252 = vst.msk [vmem:[%s1250 + $0x8] sm:$0xff] %vm797, %v1213
      %1253 = vst.msk [vmem:[%s1250 + $0x10] sm:$0xff] %vm797, %v1216
      %1254 = vst.msk [vmem:[%s1250 + $0x18] sm:$0xff] %vm797, %v1218
      %1255 = vst.msk [vmem:[%s1250 + $0x20] sm:$0xff] %vm797, %v1221
      %1256 = vst.msk [vmem:[%s1250 + $0x28] sm:$0xff] %vm797, %v1223
      %1257 = vst.msk [vmem:[%s1250 + $0x30] sm:$0xff] %vm797, %v1226
      %1258 = vst.msk [vmem:[%s1250 + $0x38] sm:$0xff] %vm797, %v1228
      %1259 = vst.msk [vmem:[%s1250 + $0x40] sm:$0xff] %vm797, %v1231
      %1260 = vst.msk [vmem:[%s1250 + $0x48] sm:$0xff] %vm797, %v1233
      %1261 = vst.msk [vmem:[%s1250 + $0x50] sm:$0xff] %vm797, %v1236
      %1262 = vst.msk [vmem:[%s1250 + $0x58] sm:$0xff] %vm797, %v1238
      %1263 = vst.msk [vmem:[%s1250 + $0x60] sm:$0xff] %vm797, %v1241
      %1264 = vst.msk [vmem:[%s1250 + $0x68] sm:$0xff] %vm797, %v1243
      %1265 = vst.msk [vmem:[%s1250 + $0x70] sm:$0xff] %vm797, %v1246
      %1266 = vst.msk [vmem:[%s1250 + $0x78] sm:$0xff] %vm797, %v1248
      %1267 = vrot.lane.b32.xlu0 %v1007, 4
      %v1268 = vpop.permute.xlu0 %1267
      %1269 = vrot.lane.b32.xlu0 %v1180, 8
      %v1270 = vpop.permute.xlu0 %1269
      %v1271 = vunpack.c.l.b16 %v691
      %v1272 = vunpack.c.l.b16 %v694
      %v1273 = vpack.c.b16 %v1272, %v1271
      %1274 = vrot.lane.b32.xlu0 %v1273, 12
      %v1275 = vpop.permute.xlu0 %1274
      %v1278 = vsel %vm797, %v780, %v1268
      %v1280 = vsel %vm822, %v1278, %v1270
      %v1282 = vsel %vm839, %v1280, %v1275
      %s1283 = scalar_lea.vmem %s2, 24
      %v1284 = vld [vmem:[%s1283] sm:$0xf]
      %v1285 = vld [vmem:[%s1283 + $0x4] sm:$0xf]
      %v1288 = vunpack.c.l.b16 %v1284
      %v1289 = vunpack.c.l.b16 %v1285
      %v1290 = vpack.c.b16 %v1289, %v1288
      %v1292 = vsel %vm867, %v1282, 0
      %1294 = vmatpush.bf16.msra.mxu0 0
      %1295 = vmatpush.bf16.msra.mxu0 0
      %1296 = vmatpush.bf16.msra.mxu0 0
      %1297 = vmatpush.bf16.msra.mxu0 0
      %1298 = vmatpush.bf16.msra.mxu0 0
      %1299 = vmatpush.bf16.msra.mxu0 0
      %1300 = vmatpush.bf16.msra.mxu0 0
      %1301 = vmatpush.bf16.msra.mxu0 %v1290
      %1302 = vmatmul.bf16.gmra.mxu0 %v1091
      %v1303 = vpop.f32.mrf.mxu0
      %v1304 = vadd.f32 %v859, %v1303
      %v1305 = vpop.f32.mrf.mxu0
      %v1306 = vadd.f32 %v859, %v1305
      %1307 = vmatmul.bf16.gmra.mxu0 %v1093
      %v1308 = vpop.f32.mrf.mxu0
      %v1309 = vadd.f32 %v859, %v1308
      %v1310 = vpop.f32.mrf.mxu0
      %v1311 = vadd.f32 %v859, %v1310
      %1312 = vmatmul.bf16.gmra.mxu0 %v1095
      %v1313 = vpop.f32.mrf.mxu0
      %v1314 = vadd.f32 %v859, %v1313
      %v1315 = vpop.f32.mrf.mxu0
      %v1316 = vadd.f32 %v859, %v1315
      %1317 = vmatmul.bf16.gmra.mxu0 %v1097
      %v1318 = vpop.f32.mrf.mxu0
      %v1319 = vadd.f32 %v859, %v1318
      %v1320 = vpop.f32.mrf.mxu0
      %v1321 = vadd.f32 %v859, %v1320
      %1322 = vmatmul.bf16.gmra.mxu0 %v1099
      %v1323 = vpop.f32.mrf.mxu0
      %v1324 = vadd.f32 %v859, %v1323
      %v1325 = vpop.f32.mrf.mxu0
      %v1326 = vadd.f32 %v859, %v1325
      %1327 = vmatmul.bf16.gmra.mxu0 %v1101
      %v1328 = vpop.f32.mrf.mxu0
      %v1329 = vadd.f32 %v859, %v1328
      %v1330 = vpop.f32.mrf.mxu0
      %v1331 = vadd.f32 %v859, %v1330
      %1332 = vmatmul.bf16.gmra.mxu0 %v1103
      %v1333 = vpop.f32.mrf.mxu0
      %v1334 = vadd.f32 %v859, %v1333
      %v1335 = vpop.f32.mrf.mxu0
      %v1336 = vadd.f32 %v859, %v1335
      %1337 = vmatmul.bf16.gmra.mxu0 %v1292
      %v1338 = vpop.f32.mrf.mxu0
      %v1339 = vadd.f32 %v859, %v1338
      %v1340 = vpop.f32.mrf.mxu0
      %v1341 = vadd.f32 %v859, %v1340
      %1342 = vdwg.mxu0
      %s1343 = scalar_lea.vmem %s316, 384
      %1344 = vst.msk [vmem:[%s1343] sm:$0xff] %vm797, %v1304
      %1345 = vst.msk [vmem:[%s1343 + $0x8] sm:$0xff] %vm797, %v1306
      %1346 = vst.msk [vmem:[%s1343 + $0x10] sm:$0xff] %vm797, %v1309
      %1347 = vst.msk [vmem:[%s1343 + $0x18] sm:$0xff] %vm797, %v1311
      %1348 = vst.msk [vmem:[%s1343 + $0x20] sm:$0xff] %vm797, %v1314
      %1349 = vst.msk [vmem:[%s1343 + $0x28] sm:$0xff] %vm797, %v1316
      %1350 = vst.msk [vmem:[%s1343 + $0x30] sm:$0xff] %vm797, %v1319
      %1351 = vst.msk [vmem:[%s1343 + $0x38] sm:$0xff] %vm797, %v1321
      %1352 = vst.msk [vmem:[%s1343 + $0x40] sm:$0xff] %vm797, %v1324
      %1353 = vst.msk [vmem:[%s1343 + $0x48] sm:$0xff] %vm797, %v1326
      %1354 = vst.msk [vmem:[%s1343 + $0x50] sm:$0xff] %vm797, %v1329
      %1355 = vst.msk [vmem:[%s1343 + $0x58] sm:$0xff] %vm797, %v1331
      %1356 = vst.msk [vmem:[%s1343 + $0x60] sm:$0xff] %vm797, %v1334
      %1357 = vst.msk [vmem:[%s1343 + $0x68] sm:$0xff] %vm797, %v1336
      %1358 = vst.msk [vmem:[%s1343 + $0x70] sm:$0xff] %vm797, %v1339
      %1359 = vst.msk [vmem:[%s1343 + $0x78] sm:$0xff] %vm797, %v1341
      %p1360 = scmp.lt.s32.totalorder %s19, 1
      %s1361 = scalar_select %p1360, %s19, 1
      %p1362 = scmp.lt.s32.totalorder %s20, 1
      %s1363 = scalar_select %p1362, %s20, 1
      %s1364 = smul.addr %s1363, 64
      %s1365 = smul.addr %s1361, 128
      %s1366 = sadd.s32 %s1364, %s1365
      %s1367 = smul.addr %s1366, 8
      %s1368 = scalar_lea.vmem %s4, %s1367
      // Predicated region
      $region37: #{tpu_custom_call.1} parent=35 // pred_check
        %p1369 = pneg %p149
      $region38: #{tpu_custom_call.1} parent=35 // pred_check_branch
        %1371 = sbr.rel (%p1369) target = $region40
      $region39: #{tpu_custom_call.1} parent=35 // pred_region
        _
      $region40: #{tpu_custom_call.1} parent=35 // pred_fallthru
        _
    $region36: #{tpu_custom_call.1} parent=5 // pred_fallthru
      _
    %p1372 = scmp.le.s32.totalorder 2, %s10
    // Predicated region
    $region41: #{tpu_custom_call.1} parent=5 // pred_check
      %p1373 = pneg %p1372
    $region42: #{tpu_custom_call.1} parent=5 // pred_check_branch
      %1375 = sbr.rel (%p1373) target = $region44
    $region43: #{tpu_custom_call.1} parent=5 // pred_region
      %s1376 = ssub.s32 %s10, 2
      // Predicated region
      $region45: #{tpu_custom_call.1} parent=43 // pred_check
        %p1377 = pneg %p155
      $region46: #{tpu_custom_call.1} parent=43 // pred_check_branch
        %1379 = sbr.rel (%p1377) target = $region48
      $region47: #{tpu_custom_call.1} parent=43 // pred_region
        %p1380 = scmp.lt.s32.totalorder %s21, 1
        %s1381 = scalar_select %p1380, %s21, 1
        %p1382 = scmp.lt.s32.totalorder %s22, 1
        %s1383 = scalar_select %p1382, %s22, 1
        %s1384 = smul.addr %s1383, 64
        %s1385 = smul.addr %s1381, 128
        %s1386 = sadd.s32 %s1384, %s1385
        %s1387 = smul.addr %s1386, 8
        %s1388 = scalar_lea.vmem %s4, %s1387
      $region48: #{tpu_custom_call.1} parent=43 // pred_fallthru
        _
    $region44: #{tpu_custom_call.1} parent=5 // pred_fallthru
      _
  $region6: #{tpu_custom_call.1} parent=0 // loop_footer
    %s14 = sadd.s32 1, %s10
  $region7: #{tpu_custom_call.1} parent=0 // loop_footer_branch
    %9 = sbr.rel target = $region3
  $region8: #{tpu_custom_call.1} parent=0 // loop_exit
    _

</llo_original>
